<compile_context>
chip_gen: v5e
topology: v5e:2x2
jax: 0.10.0
libtpu: 0.0.40
codegen_flags: <defaults>
</compile_context>

<pallas_src>
import jax
import jax.numpy as jnp
from jax.experimental import pallas as pl
from jax.experimental.pallas import tpu as pltpu


def dqn_kernel(xT_ref, w1T_ref, b1_ref, w2T_ref, b2_ref, outT_ref):
    # xT_ref:  (4, TB)     lane-dense batch tile
    # w1T_ref: (128, 4)    resident
    # b1_ref:  (128, 1)    resident
    # w2T_ref: (2, 128)    resident
    # b2_ref:  (2, 1)      resident
    # outT_ref:(2, TB)     lane-dense output tile
    hT = jnp.dot(w1T_ref[...], xT_ref[...],
                 preferred_element_type=jnp.float32) + b1_ref[...]      # (128, TB)
    hT = jnp.maximum(hT, 0.0)
    oT = jnp.dot(w2T_ref[...], hT,
                 preferred_element_type=jnp.float32) + b2_ref[...]      # (2, TB)
    outT_ref[...] = oT.astype(outT_ref.dtype)


def dqn_forward(x, w1, b1, w2, b2, *, tb=8192):
    """x: (B, 4) f32; w1: (4,128); b1: (1,128); w2: (128,2); b2: (1,2) -> (B, 2).

    Note: for genuinely tiny batches (e.g. a handful of states) a fused XLA op is at
    least as fast -- this kernel pays off at replay-buffer-scale batches.
    """
    B = x.shape[0]
    H = w1.shape[1]       # 128
    n_out = w2.shape[1]   # 2

    # One-time layout plumbing in the wrapper: transposed params / inputs.
    w1T = w1.T            # (128, 4)
    b1c = b1.T            # (128, 1)
    w2T = w2.T            # (2, 128)
    b2c = b2.T            # (2, 1)

    # Batch tile: lane-dense multiple of 128, capped at `tb`.
    B128 = pl.cdiv(B, 128) * 128
    TB = min(tb, B128)
    if TB >= B128 and B128 >= 256:
        # Split into >= 2 grid steps so both v7x TensorCores get work (no-op on v5e/v6e).
        TB = pl.cdiv(B128 // 2, 128) * 128
    B_pad = pl.cdiv(B, TB) * TB

    # Pad batch (padded columns are zero; their outputs are sliced off below) and
    # transpose once so the kernel sees lane-dense (4, B_pad).
    x_pad = x if B_pad == B else jnp.pad(x, ((0, B_pad - B), (0, 0)))
    xT = x_pad.T          # (4, B_pad)

    outT = pl.pallas_call(
        dqn_kernel,
        out_shape=jax.ShapeDtypeStruct((n_out, B_pad), jnp.float32),
        grid=(B_pad // TB,),
        in_specs=[
            pl.BlockSpec((4, TB), lambda i: (0, i)),       # xT: batch-tiled, pipelined
            pl.BlockSpec((H, 4), lambda i: (0, 0)),        # w1T: resident
            pl.BlockSpec((H, 1), lambda i: (0, 0)),        # b1:  resident
            pl.BlockSpec((n_out, H), lambda i: (0, 0)),    # w2T: resident
            pl.BlockSpec((n_out, 1), lambda i: (0, 0)),    # b2:  resident
        ],
        out_specs=pl.BlockSpec((n_out, TB), lambda i: (0, i)),  # compact lane-dense store
        compiler_params=pltpu.CompilerParams(
            dimension_semantics=("parallel",),
        ),
    )(xT, w1T, b1c, w2T, b2c)

    return outT[:, :B].T  # (B, 2)


def init_params(key):
    # Deterministic init mimicking PyTorch nn.Linear default:
    # U(-1/sqrt(fan_in), 1/sqrt(fan_in)) for both weight and bias.
    k1, k2, k3, k4 = jax.random.split(key, 4)
    lim1 = 1.0 / jnp.sqrt(4.0)
    lim2 = 1.0 / jnp.sqrt(128.0)
    w1 = jax.random.uniform(k1, (4, 128), jnp.float32, -lim1, lim1)
    b1 = jax.random.uniform(k2, (1, 128), jnp.float32, -lim1, lim1)
    w2 = jax.random.uniform(k3, (128, 2), jnp.float32, -lim2, lim2)
    b2 = jax.random.uniform(k4, (1, 2), jnp.float32, -lim2, lim2)
    return w1, b1, w2, b2


if __name__ == "__main__":
    key = jax.random.PRNGKey(0)
    k_x, k_p = jax.random.split(key)

    batch = 8  # small batch of 4-dim CartPole-style states (kernel shines at large B)
    x = jax.random.normal(k_x, (batch, 4), jnp.float32)
    w1, b1, w2, b2 = init_params(k_p)

    out = dqn_forward(x, w1, b1, w2, b2)
    out = jax.block_until_ready(out)

    # Reference check in plain JAX (same math as the PyTorch module).
    ref = jnp.maximum(x @ w1 + b1, 0.0) @ w2 + b2
    assert out.shape == (batch, 2)
    assert jnp.allclose(out, ref, atol=1e-5, rtol=1e-5)

    print("KERNEL_OK")
</pallas_src>

<mosaic_0001>
module attributes {stable_mosaic.version = 11 : i64} {
  func.func @dqn_kernel(%arg0: i32, %arg1: memref<4x128xf32, #tpu.memory_space<vmem>>, %arg2: memref<128x4xf32, #tpu.memory_space<vmem>>, %arg3: memref<128x1xf32, #tpu.memory_space<vmem>>, %arg4: memref<2x128xf32, #tpu.memory_space<vmem>>, %arg5: memref<2x1xf32, #tpu.memory_space<vmem>>, %arg6: memref<2x128xf32, #tpu.memory_space<vmem>>) attributes {dimension_semantics = [#tpu.dimension_semantics<parallel>], iteration_bounds = array<i64: 1>, scalar_prefetch = 0 : i64, scratch_operands = 0 : i64, tpu.core_type = #tpu.core_type<tc>, window_params = [{transform_indices = @transform_0, window_bounds = array<i64: 4, 128>}, {pipeline_mode = #tpu.pipeline_mode<synchronous>, transform_indices = @transform_1, window_bounds = array<i64: 128, 4>}, {pipeline_mode = #tpu.pipeline_mode<synchronous>, transform_indices = @transform_2, window_bounds = array<i64: 128, 1>}, {pipeline_mode = #tpu.pipeline_mode<synchronous>, transform_indices = @transform_3, window_bounds = array<i64: 2, 128>}, {pipeline_mode = #tpu.pipeline_mode<synchronous>, transform_indices = @transform_4, window_bounds = array<i64: 2, 1>}, {transform_indices = @transform_5, window_bounds = array<i64: 2, 128>}]} {
    %c0 = arith.constant 0 : index
    %c0_0 = arith.constant 0 : index
    %0 = vector.load %arg2[%c0, %c0_0] : memref<128x4xf32, #tpu.memory_space<vmem>>, vector<128x4xf32>
    %c0_1 = arith.constant 0 : index
    %c0_2 = arith.constant 0 : index
    %1 = vector.load %arg1[%c0_1, %c0_2] : memref<4x128xf32, #tpu.memory_space<vmem>>, vector<4x128xf32>
    %cst = arith.constant dense<0.000000e+00> : vector<128x128xf32>
    %2 = tpu.matmul %0, %1, %cst {dimension_numbers = #tpu.dot_dimension_numbers<[1], [0], [0], [1], [0, 0, 1, 1], [], []>} : vector<128x4xf32>, vector<4x128xf32>, vector<128x128xf32> -> vector<128x128xf32>
    %c0_3 = arith.constant 0 : index
    %c0_4 = arith.constant 0 : index
    %3 = vector.load %arg3[%c0_3, %c0_4] : memref<128x1xf32, #tpu.memory_space<vmem>>, vector<128x1xf32>
    %4 = vector.broadcast %3 : vector<128x1xf32> to vector<128x128xf32>
    %5 = arith.addf %2, %4 : vector<128x128xf32>
    %cst_5 = arith.constant 0.000000e+00 : f32
    %6 = vector.broadcast %cst_5 : f32 to vector<128x128xf32>
    %7 = arith.maximumf %5, %6 : vector<128x128xf32>
    %c0_6 = arith.constant 0 : index
    %c0_7 = arith.constant 0 : index
    %8 = vector.load %arg4[%c0_6, %c0_7] : memref<2x128xf32, #tpu.memory_space<vmem>>, vector<2x128xf32>
    %cst_8 = arith.constant dense<0.000000e+00> : vector<2x128xf32>
    %9 = tpu.matmul %8, %7, %cst_8 {dimension_numbers = #tpu.dot_dimension_numbers<[1], [0], [0], [1], [0, 0, 1, 1], [], []>} : vector<2x128xf32>, vector<128x128xf32>, vector<2x128xf32> -> vector<2x128xf32>
    %c0_9 = arith.constant 0 : index
    %c0_10 = arith.constant 0 : index
    %10 = vector.load %arg5[%c0_9, %c0_10] : memref<2x1xf32, #tpu.memory_space<vmem>>, vector<2x1xf32>
    %11 = vector.broadcast %10 : vector<2x1xf32> to vector<2x128xf32>
    %12 = arith.addf %9, %11 : vector<2x128xf32>
    %c0_11 = arith.constant 0 : index
    %c0_12 = arith.constant 0 : index
    %13 = vector.load %arg6[%c0_11, %c0_12] : memref<2x128xf32, #tpu.memory_space<vmem>>, vector<2x128xf32>
    tpu.vector_store %arg6[%c0_11, %c0_12], %12 {strides = array<i32>} : memref<2x128xf32, #tpu.memory_space<vmem>>, vector<2x128xf32>,
    return
  }
  func.func @transform_0(%arg0: i32) -> (i32, i32) {
    %c0_i32 = arith.constant 0 : i32
    %c0_i32_0 = arith.constant 0 : i32
    return %c0_i32, %arg0 : i32, i32
  }
  func.func @transform_1(%arg0: i32) -> (i32, i32) {
    %c0_i32 = arith.constant 0 : i32
    %c0_i32_0 = arith.constant 0 : i32
    %c0_i32_1 = arith.constant 0 : i32
    return %c0_i32, %c0_i32_0 : i32, i32
  }
  func.func @transform_2(%arg0: i32) -> (i32, i32) {
    %c0_i32 = arith.constant 0 : i32
    %c0_i32_0 = arith.constant 0 : i32
    %c0_i32_1 = arith.constant 0 : i32
    return %c0_i32, %c0_i32_0 : i32, i32
  }
  func.func @transform_3(%arg0: i32) -> (i32, i32) {
    %c0_i32 = arith.constant 0 : i32
    %c0_i32_0 = arith.constant 0 : i32
    %c0_i32_1 = arith.constant 0 : i32
    return %c0_i32, %c0_i32_0 : i32, i32
  }
  func.func @transform_4(%arg0: i32) -> (i32, i32) {
    %c0_i32 = arith.constant 0 : i32
    %c0_i32_0 = arith.constant 0 : i32
    %c0_i32_1 = arith.constant 0 : i32
    return %c0_i32, %c0_i32_0 : i32, i32
  }
  func.func @transform_5(%arg0: i32) -> (i32, i32) {
    %c0_i32 = arith.constant 0 : i32
    %c0_i32_0 = arith.constant 0 : i32
    return %c0_i32, %arg0 : i32, i32
  }
}

</mosaic_0001>

<llo_original>
// kernel: tpu_custom_call.1
$region0: #{tpu_custom_call.1}
  #allocation0 [shape = 'u32[]', space=smem, size = 0x4, offset = 0x4, fixed_abs, tag = 'smem constant byte address 0x4 - core index']
  #allocation1 [shape = 'u32[72,128]{1,0:T(1,128)}', space=vmem, size = 0x9000, scoped, tag = 'internal scratch']
  %s0 = inlined_call_operand.vmem [shape: f32[4,128], index: 0, kind: input, shape index: {}]
  %s1 = inlined_call_operand.vmem [shape: f32[128,4], index: 1, kind: input, shape index: {}]
  %s2 = inlined_call_operand.vmem [shape: f32[128,1], index: 2, kind: input, shape index: {}]
  %s3 = inlined_call_operand.vmem [shape: f32[2,128], index: 3, kind: input, shape index: {}]
  %s4 = inlined_call_operand.vmem [shape: f32[2,1], index: 4, kind: input, shape index: {}]
  %s5 = inlined_call_operand.hbm [shape: f32[2,128], index: 5, kind: output, shape index: {}]
  %s6 = sld [smem:[#allocation0]]
  $region30: #{tpu_custom_call.1} parent=0
    _
  %s8 = ssub.s32 1, %s6
  %s9 = scalar_select 0, %s8, %s6
  $region1: #{tpu_custom_call.1} parent=0
    #allocation2 [shape = 'u8[1024]{0}', space=vmem, size = 0x400, scoped, tag = 'output window, operand 0, single buffered']
    #allocation3 [shape = 's32[1]{0}', space=sflag, size = 0x4, scoped, tag = 'scoped memory for tpu_custom_call.1']
    %10 = vsyncpa [#allocation3], 0
    // Predicated region
    $region2: #{tpu_custom_call.1} parent=1 // pred_check
      _
    $region3: #{tpu_custom_call.1} parent=1 // pred_check_branch
      %12 = sbr.rel (0) target = $region5
    $region4: #{tpu_custom_call.1} parent=1 // pred_region
      _
    $region5: #{tpu_custom_call.1} parent=1 // pred_fallthru
      _
    // Predicated region
    $region6: #{tpu_custom_call.1} parent=1 // pred_check
      _
    $region7: #{tpu_custom_call.1} parent=1 // pred_check_branch
      %14 = sbr.rel (0) target = $region9
    $region8: #{tpu_custom_call.1} parent=1 // pred_region
      _
    $region9: #{tpu_custom_call.1} parent=1 // pred_fallthru
      _
    // Predicated region
    $region10: #{tpu_custom_call.1} parent=1 // pred_check
      _
    $region11: #{tpu_custom_call.1} parent=1 // pred_check_branch
      %16 = sbr.rel (0) target = $region13
    $region12: #{tpu_custom_call.1} parent=1 // pred_region
      _
    $region13: #{tpu_custom_call.1} parent=1 // pred_fallthru
      _
    // Predicated region
    $region14: #{tpu_custom_call.1} parent=1 // pred_check
      _
    $region15: #{tpu_custom_call.1} parent=1 // pred_check_branch
      %18 = sbr.rel (0) target = $region17
    $region16: #{tpu_custom_call.1} parent=1 // pred_region
      _
    $region17: #{tpu_custom_call.1} parent=1 // pred_fallthru
      _
    // Predicated region
    $region18: #{tpu_custom_call.1} parent=1 // pred_check
      _
    $region19: #{tpu_custom_call.1} parent=1 // pred_check_branch
      %20 = sbr.rel (0) target = $region21
    $region20: #{tpu_custom_call.1} parent=1 // pred_region
      _
    $region21: #{tpu_custom_call.1} parent=1 // pred_fallthru
      _
    %v21 = vld [vmem:[%s1] sm:$0xff]
    %v22 = vld [vmem:[%s1 + $0x8] sm:$0xff]
    %v23 = vld [vmem:[%s1 + $0x10] sm:$0xff]
    %v24 = vld [vmem:[%s1 + $0x18] sm:$0xff]
    %v25 = vld [vmem:[%s1 + $0x20] sm:$0xff]
    %v26 = vld [vmem:[%s1 + $0x28] sm:$0xff]
    %v27 = vld [vmem:[%s1 + $0x30] sm:$0xff]
    %v28 = vld [vmem:[%s1 + $0x38] sm:$0xff]
    %v29 = vld [vmem:[%s1 + $0x40] sm:$0xff]
    %v30 = vld [vmem:[%s1 + $0x48] sm:$0xff]
    %v31 = vld [vmem:[%s1 + $0x50] sm:$0xff]
    %v32 = vld [vmem:[%s1 + $0x58] sm:$0xff]
    %v33 = vld [vmem:[%s1 + $0x60] sm:$0xff]
    %v34 = vld [vmem:[%s1 + $0x68] sm:$0xff]
    %v35 = vld [vmem:[%s1 + $0x70] sm:$0xff]
    %v36 = vld [vmem:[%s1 + $0x78] sm:$0xff]
    %v37 = vld [vmem:[%s0] sm:$0xf]
    %v38 = vld [vmem:[%s2] sm:$0xff]
    %v39 = vld [vmem:[%s2 + $0x8] sm:$0xff]
    %v40 = vld [vmem:[%s2 + $0x10] sm:$0xff]
    %v41 = vld [vmem:[%s2 + $0x18] sm:$0xff]
    %v42 = vld [vmem:[%s2 + $0x20] sm:$0xff]
    %v43 = vld [vmem:[%s2 + $0x28] sm:$0xff]
    %v44 = vld [vmem:[%s2 + $0x30] sm:$0xff]
    %v45 = vld [vmem:[%s2 + $0x38] sm:$0xff]
    %v46 = vld [vmem:[%s2 + $0x40] sm:$0xff]
    %v47 = vld [vmem:[%s2 + $0x48] sm:$0xff]
    %v48 = vld [vmem:[%s2 + $0x50] sm:$0xff]
    %v49 = vld [vmem:[%s2 + $0x58] sm:$0xff]
    %v50 = vld [vmem:[%s2 + $0x60] sm:$0xff]
    %v51 = vld [vmem:[%s2 + $0x68] sm:$0xff]
    %v52 = vld [vmem:[%s2 + $0x70] sm:$0xff]
    %v53 = vld [vmem:[%s2 + $0x78] sm:$0xff]
    %55 = vset.pattern.permute.xlu0 0
    %56 = vperm.xlu0 %55, %v38
    %v57 = vpop.permute.xlu0 %56
    %60 = vset.pattern.permute.xlu0 0
    %61 = vperm.xlu0 %60, %v39
    %v62 = vpop.permute.xlu0 %61
    %65 = vset.pattern.permute.xlu0 0
    %66 = vperm.xlu0 %65, %v40
    %v67 = vpop.permute.xlu0 %66
    %70 = vset.pattern.permute.xlu0 0
    %71 = vperm.xlu0 %70, %v41
    %v72 = vpop.permute.xlu0 %71
    %75 = vset.pattern.permute.xlu0 0
    %76 = vperm.xlu0 %75, %v42
    %v77 = vpop.permute.xlu0 %76
    %80 = vset.pattern.permute.xlu0 0
    %81 = vperm.xlu0 %80, %v43
    %v82 = vpop.permute.xlu0 %81
    %85 = vset.pattern.permute.xlu0 0
    %86 = vperm.xlu0 %85, %v44
    %v87 = vpop.permute.xlu0 %86
    %90 = vset.pattern.permute.xlu0 0
    %91 = vperm.xlu0 %90, %v45
    %v92 = vpop.permute.xlu0 %91
    %95 = vset.pattern.permute.xlu0 0
    %96 = vperm.xlu0 %95, %v46
    %v97 = vpop.permute.xlu0 %96
    %100 = vset.pattern.permute.xlu0 0
    %101 = vperm.xlu0 %100, %v47
    %v102 = vpop.permute.xlu0 %101
    %105 = vset.pattern.permute.xlu0 0
    %106 = vperm.xlu0 %105, %v48
    %v107 = vpop.permute.xlu0 %106
    %110 = vset.pattern.permute.xlu0 0
    %111 = vperm.xlu0 %110, %v49
    %v112 = vpop.permute.xlu0 %111
    %115 = vset.pattern.permute.xlu0 0
    %116 = vperm.xlu0 %115, %v50
    %v117 = vpop.permute.xlu0 %116
    %120 = vset.pattern.permute.xlu0 0
    %121 = vperm.xlu0 %120, %v51
    %v122 = vpop.permute.xlu0 %121
    %125 = vset.pattern.permute.xlu0 0
    %126 = vperm.xlu0 %125, %v52
    %v127 = vpop.permute.xlu0 %126
    %130 = vset.pattern.permute.xlu0 0
    %131 = vperm.xlu0 %130, %v53
    %v132 = vpop.permute.xlu0 %131
    %vm134 = vcmask 31744
    %v136 = vsel %vm134, %v21, 0
    %v139 = vsel %vm134, %v22, 0
    %v142 = vsel %vm134, %v23, 0
    %v145 = vsel %vm134, %v24, 0
    %v148 = vsel %vm134, %v25, 0
    %v151 = vsel %vm134, %v26, 0
    %v154 = vsel %vm134, %v27, 0
    %v157 = vsel %vm134, %v28, 0
    %v160 = vsel %vm134, %v29, 0
    %v163 = vsel %vm134, %v30, 0
    %v166 = vsel %vm134, %v31, 0
    %v169 = vsel %vm134, %v32, 0
    %v172 = vsel %vm134, %v33, 0
    %v175 = vsel %vm134, %v34, 0
    %v178 = vsel %vm134, %v35, 0
    %v181 = vsel %vm134, %v36, 0
    %vm183 = vcmask 1043456
    %v185 = vsel %vm183, %v37, 0
    %187 = vmatpush.msra.mxu0 0.0
    %188 = vmatpush.msra.mxu0 0.0
    %189 = vmatpush.msra.mxu0 0.0
    %190 = vmatpush.msra.mxu0 0.0
    %191 = vmatpush.msra.mxu0 0.0
    %192 = vmatpush.msra.mxu0 0.0
    %193 = vmatpush.msra.mxu0 0.0
    %194 = vmatpush.msra.mxu0 0.0
    %195 = vmatpush.msra.mxu0 0.0
    %196 = vmatpush.msra.mxu0 0.0
    %197 = vmatpush.msra.mxu0 0.0
    %198 = vmatpush.msra.mxu0 0.0
    %199 = vmatpush.msra.mxu0 0.0
    %200 = vmatpush.msra.mxu0 0.0
    %201 = vmatpush.msra.mxu0 0.0
    %202 = vmatpush.msra.mxu0 %v185
    %203 = vmatmul.f32.gmra.mxu0 %v136
    %v204 = vpop.f32.mrf.mxu0
    %v205 = vadd.f32 %v57, %v204
    %206 = vmatmul.f32.gmra.mxu0 %v139
    %v207 = vpop.f32.mrf.mxu0
    %v208 = vadd.f32 %v62, %v207
    %209 = vmatmul.f32.gmra.mxu0 %v142
    %v210 = vpop.f32.mrf.mxu0
    %v211 = vadd.f32 %v67, %v210
    %212 = vmatmul.f32.gmra.mxu0 %v145
    %v213 = vpop.f32.mrf.mxu0
    %v214 = vadd.f32 %v72, %v213
    %215 = vmatmul.f32.gmra.mxu0 %v148
    %v216 = vpop.f32.mrf.mxu0
    %v217 = vadd.f32 %v77, %v216
    %218 = vmatmul.f32.gmra.mxu0 %v151
    %v219 = vpop.f32.mrf.mxu0
    %v220 = vadd.f32 %v82, %v219
    %221 = vmatmul.f32.gmra.mxu0 %v154
    %v222 = vpop.f32.mrf.mxu0
    %v223 = vadd.f32 %v87, %v222
    %224 = vmatmul.f32.gmra.mxu0 %v157
    %v225 = vpop.f32.mrf.mxu0
    %v226 = vadd.f32 %v92, %v225
    %227 = vmatmul.f32.gmra.mxu0 %v160
    %v228 = vpop.f32.mrf.mxu0
    %v229 = vadd.f32 %v97, %v228
    %230 = vmatmul.f32.gmra.mxu0 %v163
    %v231 = vpop.f32.mrf.mxu0
    %v232 = vadd.f32 %v102, %v231
    %233 = vmatmul.f32.gmra.mxu0 %v166
    %v234 = vpop.f32.mrf.mxu0
    %v235 = vadd.f32 %v107, %v234
    %236 = vmatmul.f32.gmra.mxu0 %v169
    %v237 = vpop.f32.mrf.mxu0
    %v238 = vadd.f32 %v112, %v237
    %239 = vmatmul.f32.gmra.mxu0 %v172
    %v240 = vpop.f32.mrf.mxu0
    %v241 = vadd.f32 %v117, %v240
    %242 = vmatmul.f32.gmra.mxu0 %v175
    %v243 = vpop.f32.mrf.mxu0
    %v244 = vadd.f32 %v122, %v243
    %245 = vmatmul.f32.gmra.mxu0 %v178
    %v246 = vpop.f32.mrf.mxu0
    %v247 = vadd.f32 %v127, %v246
    %248 = vmatmul.f32.gmra.mxu0 %v181
    %v249 = vpop.f32.mrf.mxu0
    %v250 = vadd.f32 %v132, %v249
    %251 = vdwg.mxu0
    %v252 = vmax.f32 %v205, 0.0
    %v253 = vmax.f32 %v208, 0.0
    %v254 = vmax.f32 %v211, 0.0
    %v255 = vmax.f32 %v214, 0.0
    %v256 = vmax.f32 %v217, 0.0
    %v257 = vmax.f32 %v220, 0.0
    %v258 = vmax.f32 %v223, 0.0
    %v259 = vmax.f32 %v226, 0.0
    %v260 = vmax.f32 %v229, 0.0
    %v261 = vmax.f32 %v232, 0.0
    %v262 = vmax.f32 %v235, 0.0
    %v263 = vmax.f32 %v238, 0.0
    %v264 = vmax.f32 %v241, 0.0
    %v265 = vmax.f32 %v244, 0.0
    %v266 = vmax.f32 %v247, 0.0
    %v267 = vmax.f32 %v250, 0.0
    %v268 = vld [vmem:[%s3] sm:$0x3]
    %v269 = vld [vmem:[%s4] sm:$0x3]
    %271 = vset.pattern.permute.xlu0 0
    %272 = vperm.xlu0 %271, %v269
    %v273 = vpop.permute.xlu0 %272
    %275 = vmatpush.msra.mxu0 %v267
    %276 = vmatpush.msra.mxu0 %v266
    %277 = vmatpush.msra.mxu0 %v265
    %278 = vmatpush.msra.mxu0 %v264
    %279 = vmatpush.msra.mxu0 %v263
    %280 = vmatpush.msra.mxu0 %v262
    %281 = vmatpush.msra.mxu0 %v261
    %282 = vmatpush.msra.mxu0 %v260
    %283 = vmatpush.msra.mxu0 %v259
    %284 = vmatpush.msra.mxu0 %v258
    %285 = vmatpush.msra.mxu0 %v257
    %286 = vmatpush.msra.mxu0 %v256
    %287 = vmatpush.msra.mxu0 %v255
    %288 = vmatpush.msra.mxu0 %v254
    %289 = vmatpush.msra.mxu0 %v253
    %290 = vmatpush.msra.mxu0 %v252
    %291 = vmatmul.f32.gmra.mxu0 %v268
    %v292 = vpop.f32.mrf.mxu0
    %v293 = vadd.f32 %v273, %v292
    %294 = vdwg.mxu0
    %295 = vst [vmem:[#allocation2] sm:$0x3] %v293
    // Predicated region
    $region22: #{tpu_custom_call.1} parent=1 // pred_check
      _
    $region23: #{tpu_custom_call.1} parent=1 // pred_check_branch
      %297 = sbr.rel (0) target = $region25
    $region24: #{tpu_custom_call.1} parent=1 // pred_region
      %299 = vsyncadd [#allocation3], 0
      %s301 = sshll.u32 [#allocation2], 4
      %s302 = int_to_ptr.vmem [resolvable:$true] %s301
      %s303 = sshll.u32 %s5, 4
      %s304 = int_to_ptr.hbm [resolvable:$true] %s303
      %306 = dma.vmem_to_hbm [thread:$0]  %s302, 32, %s304, [#allocation3]
    $region25: #{tpu_custom_call.1} parent=1 // pred_fallthru
      _
    // Predicated region
    $region26: #{tpu_custom_call.1} parent=1 // pred_check
      _
    $region27: #{tpu_custom_call.1} parent=1 // pred_check_branch
      %308 = sbr.rel (0) target = $region29
    $region28: #{tpu_custom_call.1} parent=1 // pred_region
      %310 = dma.done [#allocation3], 32
    $region29: #{tpu_custom_call.1} parent=1 // pred_fallthru
      _
    %311 = vsyncpa [#allocation3], 1

</llo_original>
